<compile_context>
chip_gen: v7x
topology: tpu7x:2x2x1
jax: 0.10.0
libtpu: 0.0.40
codegen_flags: <defaults>
</compile_context>

<pallas_src>
import jax
import jax.numpy as jnp
from jax import lax
from jax.experimental import pallas as pl
from jax.experimental.pallas import tpu as pltpu

IN_FEATURES = 784
H1 = 14
H2 = 14
OUT_FEATURES = 10


def _make_mlp_kernel(batch, tile_b):
    """Kernel over one feature-major batch tile: x^T (784, tb) -> probs^T (10, tb)."""
    ragged = (batch % tile_b) != 0

    def kernel(x_ref, w1_ref, b1_ref, w2_ref, b2_ref, w3_ref, b3_ref, o_ref):
        xt = x_ref[...]                                          # (784, tb) bf16

        # layer_1 + ReLU : (14, 784) @ (784, tb) -> (14, tb), f32 accumulation.
        h1 = jnp.dot(w1_ref[...], xt,
                     preferred_element_type=jnp.float32) + b1_ref[...]
        h1 = jnp.maximum(h1, 0.0)

        # layer_2 + ReLU : (14, 14) @ (14, tb) -> (14, tb)
        h2 = jnp.dot(w2_ref[...], h1,
                     preferred_element_type=jnp.float32) + b2_ref[...]
        h2 = jnp.maximum(h2, 0.0)

        # out_layer + ReLU : (10, 14) @ (14, tb) -> (10, tb)
        h3 = jnp.dot(w3_ref[...], h2,
                     preferred_element_type=jnp.float32) + b3_ref[...]
        h3 = jnp.maximum(h3, 0.0)

        if ragged:
            # Last block is ragged: zero the garbage (out-of-range) batch lanes
            # so no inf/NaN flows through exp; those columns are dropped on store.
            col = pl.program_id(0) * tile_b + lax.broadcasted_iota(
                jnp.int32, h3.shape, 1)
            h3 = jnp.where(col < batch, h3, 0.0)

        # softmax over features (axis 0 in the transposed layout), exact division.
        m = jnp.max(h3, axis=0, keepdims=True)                   # (1, tb)
        e = jnp.exp(h3 - m)
        denom = jnp.sum(e, axis=0, keepdims=True)
        o_ref[...] = e / denom                                   # (10, tb) lane-dense

    return kernel


def network_1_forward(x_nchw, params, *, tile_b=2048, use_core_parallel=False):
    """x_nchw: (B, 1, 28, 28) -> (B, 10) softmax probabilities (f32)."""
    w1, b1, w2, b2, w3, b3 = params            # torch layout: w (out, in), b (out, 1)
    B = x_nchw.shape[0]
    x_flat = x_nchw.reshape(B, -1)             # torch.flatten(x, 1)
    assert x_flat.shape[1] == IN_FEATURES

    # Feature-major x^T so batch sits on MXU lanes; the bf16 cast fuses into the
    # same XLA transpose op (single HBM pass, half the bytes written/read).
    x_t = jnp.transpose(x_flat).astype(jnp.bfloat16)             # (784, B)
    w1 = w1.astype(jnp.bfloat16)                                 # 22 KB, resident

    # Batch tile: full batch if it fits in one tile, else a multiple of 128
    # (lane width).  Ragged last block handled in-kernel; no jnp.pad of x.
    tb = min(tile_b, B)
    if tb != B:
        tb = max(128, (tb // 128) * 128)
    grid = (pl.cdiv(B, tb),)

    # Weights/biases pinned VMEM-resident: same block every grid step.
    def resident(shape):
        return pl.BlockSpec(shape, lambda i: (0, 0))

    in_specs = [
        pl.BlockSpec((IN_FEATURES, tb), lambda i: (0, i)),        # x^T tile
        resident((H1, IN_FEATURES)), resident((H1, 1)),           # w1, b1
        resident((H2, H1)),          resident((H2, 1)),           # w2, b2
        resident((OUT_FEATURES, H2)), resident((OUT_FEATURES, 1)),  # w3, b3
    ]
    out_spec = pl.BlockSpec((OUT_FEATURES, tb), lambda i: (0, i))

    dim_sem = (pltpu.CORE_PARALLEL if use_core_parallel else "parallel",)

    # Advisory cost estimate for XLA scheduling around the custom call.
    flops = 2 * B * (IN_FEATURES * H1 + H1 * H2 + H2 * OUT_FEATURES)
    bytes_accessed = (
        B * IN_FEATURES * x_t.dtype.itemsize
        + w1.size * w1.dtype.itemsize
        + (b1.size + w2.size + b2.size + w3.size + b3.size) * 4
        + B * OUT_FEATURES * 4
    )
    cost = pl.CostEstimate(
        flops=flops,
        transcendentals=B * OUT_FEATURES,   # exps in softmax
        bytes_accessed=bytes_accessed,
    )

    out_t = pl.pallas_call(
        _make_mlp_kernel(B, tb),
        out_shape=jax.ShapeDtypeStruct((OUT_FEATURES, B), jnp.float32),
        grid=grid,
        in_specs=in_specs,
        out_specs=out_spec,
        compiler_params=pltpu.CompilerParams(dimension_semantics=dim_sem),
        cost_estimate=cost,
    )(x_t, w1, b1, w2, b2, w3, b3)

    return out_t.T                                                # (B, 10)


def init_params(key):
    """Deterministic init mimicking nn.Linear's U(-1/sqrt(fan_in), 1/sqrt(fan_in)).

    Weights stored in the PyTorch (out, in) layout; biases as (out, 1) columns
    (the kernel broadcasts them over the batch lanes).
    """
    def linear(k, fan_in, fan_out):
        kw, kb = jax.random.split(k)
        bound = 1.0 / jnp.sqrt(jnp.float32(fan_in))
        w = jax.random.uniform(kw, (fan_out, fan_in), jnp.float32, -bound, bound)
        b = jax.random.uniform(kb, (fan_out, 1), jnp.float32, -bound, bound)
        return w, b

    k1, k2, k3 = jax.random.split(key, 3)
    w1, b1 = linear(k1, IN_FEATURES, H1)
    w2, b2 = linear(k2, H1, H2)
    w3, b3 = linear(k3, H2, OUT_FEATURES)
    return (w1, b1, w2, b2, w3, b3)


def _reference_forward(x_nchw, params):
    """Pure-JAX reference with the same operand dtypes as the kernel."""
    w1, b1, w2, b2, w3, b3 = params
    x = x_nchw.reshape(x_nchw.shape[0], -1).astype(jnp.float32)
    x = x.astype(jnp.bfloat16).astype(jnp.float32)
    w1f = w1.astype(jnp.bfloat16).astype(jnp.float32)
    hp = lax.Precision.HIGHEST
    h = jnp.maximum(jnp.dot(x, w1f.T, precision=hp) + b1.T, 0.0)
    h = jnp.maximum(jnp.dot(h, w2.T, precision=hp) + b2.T, 0.0)
    h = jnp.maximum(jnp.dot(h, w3.T, precision=hp) + b3.T, 0.0)
    return jax.nn.softmax(h, axis=1)


if __name__ == "__main__":
    key = jax.random.PRNGKey(0)
    k_params, k_x = jax.random.split(key)
    params = init_params(k_params)

    # Small MNIST-like batch: (B=2, C=1, H=28, W=28), NCHW like PyTorch.
    x = jax.random.normal(k_x, (2, 1, 28, 28), jnp.float32)

    out = network_1_forward(x, params)
    out = jax.block_until_ready(out)

    assert out.shape == (2, OUT_FEATURES)
    # Exact-division softmax: rows sum to 1 to f32 rounding.
    assert jnp.allclose(jnp.sum(out, axis=1), 1.0, atol=1e-4)
    # Match the pure-JAX reference computed with the same operand dtypes.
    ref = _reference_forward(x, params)
    assert jnp.allclose(out, ref, atol=2e-2, rtol=2e-2)

    print("KERNEL_OK")
</pallas_src>

<mosaic_0001>
module attributes {stable_mosaic.version = 11 : i64} {
  func.func @kernel(%arg0: i32, %arg1: memref<784x2xbf16, #tpu.memory_space<vmem>>, %arg2: memref<14x784xbf16, #tpu.memory_space<vmem>>, %arg3: memref<14x1xf32, #tpu.memory_space<vmem>>, %arg4: memref<14x14xf32, #tpu.memory_space<vmem>>, %arg5: memref<14x1xf32, #tpu.memory_space<vmem>>, %arg6: memref<10x14xf32, #tpu.memory_space<vmem>>, %arg7: memref<10x1xf32, #tpu.memory_space<vmem>>, %arg8: memref<10x2xf32, #tpu.memory_space<vmem>>) attributes {dimension_semantics = [#tpu.dimension_semantics<parallel>], iteration_bounds = array<i64: 1>, scalar_prefetch = 0 : i64, scratch_operands = 0 : i64, tpu.core_type = #tpu.core_type<tc>, window_params = [{transform_indices = @transform_0, window_bounds = array<i64: 784, 2>}, {pipeline_mode = #tpu.pipeline_mode<synchronous>, transform_indices = @transform_1, window_bounds = array<i64: 14, 784>}, {pipeline_mode = #tpu.pipeline_mode<synchronous>, transform_indices = @transform_2, window_bounds = array<i64: 14, 1>}, {pipeline_mode = #tpu.pipeline_mode<synchronous>, transform_indices = @transform_3, window_bounds = array<i64: 14, 14>}, {pipeline_mode = #tpu.pipeline_mode<synchronous>, transform_indices = @transform_4, window_bounds = array<i64: 14, 1>}, {pipeline_mode = #tpu.pipeline_mode<synchronous>, transform_indices = @transform_5, window_bounds = array<i64: 10, 14>}, {pipeline_mode = #tpu.pipeline_mode<synchronous>, transform_indices = @transform_6, window_bounds = array<i64: 10, 1>}, {transform_indices = @transform_7, window_bounds = array<i64: 10, 2>}]} {
    %c0 = arith.constant 0 : index
    %c0_0 = arith.constant 0 : index
    %0 = vector.load %arg1[%c0, %c0_0] : memref<784x2xbf16, #tpu.memory_space<vmem>>, vector<784x2xbf16>
    %c0_1 = arith.constant 0 : index
    %c0_2 = arith.constant 0 : index
    %1 = vector.load %arg2[%c0_1, %c0_2] : memref<14x784xbf16, #tpu.memory_space<vmem>>, vector<14x784xbf16>
    %cst = arith.constant dense<0.000000e+00> : vector<14x2xf32>
    %2 = tpu.matmul %1, %0, %cst {dimension_numbers = #tpu.dot_dimension_numbers<[1], [0], [0], [1], [0, 0, 1, 1], [], []>} : vector<14x784xbf16>, vector<784x2xbf16>, vector<14x2xf32> -> vector<14x2xf32>
    %c0_3 = arith.constant 0 : index
    %c0_4 = arith.constant 0 : index
    %3 = vector.load %arg3[%c0_3, %c0_4] : memref<14x1xf32, #tpu.memory_space<vmem>>, vector<14x1xf32>
    %4 = vector.broadcast %3 : vector<14x1xf32> to vector<14x2xf32>
    %5 = arith.addf %2, %4 : vector<14x2xf32>
    %cst_5 = arith.constant 0.000000e+00 : f32
    %6 = vector.broadcast %cst_5 : f32 to vector<14x2xf32>
    %7 = arith.maximumf %5, %6 : vector<14x2xf32>
    %c0_6 = arith.constant 0 : index
    %c0_7 = arith.constant 0 : index
    %8 = vector.load %arg4[%c0_6, %c0_7] : memref<14x14xf32, #tpu.memory_space<vmem>>, vector<14x14xf32>
    %cst_8 = arith.constant dense<0.000000e+00> : vector<14x2xf32>
    %9 = tpu.matmul %8, %7, %cst_8 {dimension_numbers = #tpu.dot_dimension_numbers<[1], [0], [0], [1], [0, 0, 1, 1], [], []>} : vector<14x14xf32>, vector<14x2xf32>, vector<14x2xf32> -> vector<14x2xf32>
    %c0_9 = arith.constant 0 : index
    %c0_10 = arith.constant 0 : index
    %10 = vector.load %arg5[%c0_9, %c0_10] : memref<14x1xf32, #tpu.memory_space<vmem>>, vector<14x1xf32>
    %11 = vector.broadcast %10 : vector<14x1xf32> to vector<14x2xf32>
    %12 = arith.addf %9, %11 : vector<14x2xf32>
    %cst_11 = arith.constant 0.000000e+00 : f32
    %13 = vector.broadcast %cst_11 : f32 to vector<14x2xf32>
    %14 = arith.maximumf %12, %13 : vector<14x2xf32>
    %c0_12 = arith.constant 0 : index
    %c0_13 = arith.constant 0 : index
    %15 = vector.load %arg6[%c0_12, %c0_13] : memref<10x14xf32, #tpu.memory_space<vmem>>, vector<10x14xf32>
    %cst_14 = arith.constant dense<0.000000e+00> : vector<10x2xf32>
    %16 = tpu.matmul %15, %14, %cst_14 {dimension_numbers = #tpu.dot_dimension_numbers<[1], [0], [0], [1], [0, 0, 1, 1], [], []>} : vector<10x14xf32>, vector<14x2xf32>, vector<10x2xf32> -> vector<10x2xf32>
    %c0_15 = arith.constant 0 : index
    %c0_16 = arith.constant 0 : index
    %17 = vector.load %arg7[%c0_15, %c0_16] : memref<10x1xf32, #tpu.memory_space<vmem>>, vector<10x1xf32>
    %18 = vector.broadcast %17 : vector<10x1xf32> to vector<10x2xf32>
    %19 = arith.addf %16, %18 : vector<10x2xf32>
    %cst_17 = arith.constant 0.000000e+00 : f32
    %20 = vector.broadcast %cst_17 : f32 to vector<10x2xf32>
    %21 = arith.maximumf %19, %20 : vector<10x2xf32>
    %cst_18 = arith.constant dense<0xFF800000> : vector<2xf32>
    %22 = vector.multi_reduction <maximumf>, %21, %cst_18 [0] : vector<10x2xf32> to vector<2xf32>
    %23 = vector.shape_cast %22 : vector<2xf32> to vector<1x2xf32>
    %24 = vector.broadcast %23 : vector<1x2xf32> to vector<10x2xf32>
    %25 = arith.subf %21, %24 : vector<10x2xf32>
    %26 = math.exp %25 : vector<10x2xf32>
    %cst_19 = arith.constant dense<0.000000e+00> : vector<2xf32>
    %27 = vector.multi_reduction <add>, %26, %cst_19 [0] : vector<10x2xf32> to vector<2xf32>
    %28 = vector.shape_cast %27 : vector<2xf32> to vector<1x2xf32>
    %29 = vector.broadcast %28 : vector<1x2xf32> to vector<10x2xf32>
    %30 = arith.divf %26, %29 : vector<10x2xf32>
    %c0_20 = arith.constant 0 : index
    %c0_21 = arith.constant 0 : index
    %31 = vector.load %arg8[%c0_20, %c0_21] : memref<10x2xf32, #tpu.memory_space<vmem>>, vector<10x2xf32>
    tpu.vector_store %arg8[%c0_20, %c0_21], %30 {strides = array<i32>} : memref<10x2xf32, #tpu.memory_space<vmem>>, vector<10x2xf32>,
    return
  }
  func.func @transform_0(%arg0: i32) -> (i32, i32) {
    %c0_i32 = arith.constant 0 : i32
    %c0_i32_0 = arith.constant 0 : i32
    return %c0_i32, %arg0 : i32, i32
  }
  func.func @transform_1(%arg0: i32) -> (i32, i32) {
    %c0_i32 = arith.constant 0 : i32
    %c0_i32_0 = arith.constant 0 : i32
    %c0_i32_1 = arith.constant 0 : i32
    return %c0_i32, %c0_i32_0 : i32, i32
  }
  func.func @transform_2(%arg0: i32) -> (i32, i32) {
    %c0_i32 = arith.constant 0 : i32
    %c0_i32_0 = arith.constant 0 : i32
    %c0_i32_1 = arith.constant 0 : i32
    return %c0_i32, %c0_i32_0 : i32, i32
  }
  func.func @transform_3(%arg0: i32) -> (i32, i32) {
    %c0_i32 = arith.constant 0 : i32
    %c0_i32_0 = arith.constant 0 : i32
    %c0_i32_1 = arith.constant 0 : i32
    return %c0_i32, %c0_i32_0 : i32, i32
  }
  func.func @transform_4(%arg0: i32) -> (i32, i32) {
    %c0_i32 = arith.constant 0 : i32
    %c0_i32_0 = arith.constant 0 : i32
    %c0_i32_1 = arith.constant 0 : i32
    return %c0_i32, %c0_i32_0 : i32, i32
  }
  func.func @transform_5(%arg0: i32) -> (i32, i32) {
    %c0_i32 = arith.constant 0 : i32
    %c0_i32_0 = arith.constant 0 : i32
    %c0_i32_1 = arith.constant 0 : i32
    return %c0_i32, %c0_i32_0 : i32, i32
  }
  func.func @transform_6(%arg0: i32) -> (i32, i32) {
    %c0_i32 = arith.constant 0 : i32
    %c0_i32_0 = arith.constant 0 : i32
    %c0_i32_1 = arith.constant 0 : i32
    return %c0_i32, %c0_i32_0 : i32, i32
  }
  func.func @transform_7(%arg0: i32) -> (i32, i32) {
    %c0_i32 = arith.constant 0 : i32
    %c0_i32_0 = arith.constant 0 : i32
    return %c0_i32, %arg0 : i32, i32
  }
}

</mosaic_0001>

<llo_original>
// kernel: tpu_custom_call.1
$region0: #{tpu_custom_call.1}
  #allocation0 [shape = 'u32[]', space=smem, size = 0x4, offset = 0x4, fixed_abs, tag = 'smem constant byte address 0x4 - core index']
  #allocation1 [shape = 'u32[144,128]{1,0:T(1,128)}', space=vmem, size = 0x12000, scoped, tag = 'internal scratch']
  %s0 = inlined_call_operand.vmem [shape: bf16[784,2], index: 0, kind: input, shape index: {}]
  %s1 = inlined_call_operand.vmem [shape: bf16[14,784], index: 1, kind: input, shape index: {}]
  %s2 = inlined_call_operand.vmem [shape: f32[14,1], index: 2, kind: input, shape index: {}]
  %s3 = inlined_call_operand.vmem [shape: f32[14,14], index: 3, kind: input, shape index: {}]
  %s4 = inlined_call_operand.vmem [shape: f32[14,1], index: 4, kind: input, shape index: {}]
  %s5 = inlined_call_operand.vmem [shape: f32[10,14], index: 5, kind: input, shape index: {}]
  %s6 = inlined_call_operand.vmem [shape: f32[10,1], index: 6, kind: input, shape index: {}]
  %s7 = inlined_call_operand.vmem [shape: f32[10,2], index: 7, kind: output, shape index: {}]
  %s8 = sld [smem:[#allocation0]]
  $region38: #{tpu_custom_call.1} parent=0
    _
  %s10 = ssub.s32 1, %s8
  %s11 = scalar_select 0, %s10, %s8
  // Predicated region
  $region2: #{tpu_custom_call.1} parent=0 // pred_check
    _
  $region3: #{tpu_custom_call.1} parent=0 // pred_check_branch
    %13 = sbr.rel (0) target = $region5
  $region4: #{tpu_custom_call.1} parent=0 // pred_region
    _
  $region5: #{tpu_custom_call.1} parent=0 // pred_fallthru
    _
  // Predicated region
  $region6: #{tpu_custom_call.1} parent=0 // pred_check
    _
  $region7: #{tpu_custom_call.1} parent=0 // pred_check_branch
    %15 = sbr.rel (0) target = $region9
  $region8: #{tpu_custom_call.1} parent=0 // pred_region
    _
  $region9: #{tpu_custom_call.1} parent=0 // pred_fallthru
    _
  // Predicated region
  $region10: #{tpu_custom_call.1} parent=0 // pred_check
    _
  $region11: #{tpu_custom_call.1} parent=0 // pred_check_branch
    %17 = sbr.rel (0) target = $region13
  $region12: #{tpu_custom_call.1} parent=0 // pred_region
    _
  $region13: #{tpu_custom_call.1} parent=0 // pred_fallthru
    _
  // Predicated region
  $region14: #{tpu_custom_call.1} parent=0 // pred_check
    _
  $region15: #{tpu_custom_call.1} parent=0 // pred_check_branch
    %19 = sbr.rel (0) target = $region17
  $region16: #{tpu_custom_call.1} parent=0 // pred_region
    _
  $region17: #{tpu_custom_call.1} parent=0 // pred_fallthru
    _
  // Predicated region
  $region18: #{tpu_custom_call.1} parent=0 // pred_check
    _
  $region19: #{tpu_custom_call.1} parent=0 // pred_check_branch
    %21 = sbr.rel (0) target = $region21
  $region20: #{tpu_custom_call.1} parent=0 // pred_region
    _
  $region21: #{tpu_custom_call.1} parent=0 // pred_fallthru
    _
  // Predicated region
  $region22: #{tpu_custom_call.1} parent=0 // pred_check
    _
  $region23: #{tpu_custom_call.1} parent=0 // pred_check_branch
    %23 = sbr.rel (0) target = $region25
  $region24: #{tpu_custom_call.1} parent=0 // pred_region
    _
  $region25: #{tpu_custom_call.1} parent=0 // pred_fallthru
    _
  // Predicated region
  $region26: #{tpu_custom_call.1} parent=0 // pred_check
    _
  $region27: #{tpu_custom_call.1} parent=0 // pred_check_branch
    %25 = sbr.rel (0) target = $region29
  $region28: #{tpu_custom_call.1} parent=0 // pred_region
    _
  $region29: #{tpu_custom_call.1} parent=0 // pred_fallthru
    _
  %v27 = vld [vmem:[%s0] sm:$0xf]
  %v28 = vld [vmem:[%s0 + $0x4] sm:$0xf]
  %v29 = vld [vmem:[%s0 + $0x8] sm:$0xf]
  %v30 = vld [vmem:[%s0 + $0xc] sm:$0xf]
  %v31 = vld [vmem:[%s0 + $0x10] sm:$0xf]
  %v32 = vld [vmem:[%s0 + $0x14] sm:$0xf]
  %v33 = vld [vmem:[%s0 + $0x18] sm:$0xf]
  %v34 = vld [vmem:[%s0 + $0x1c] sm:$0xf]
  %v35 = vld [vmem:[%s0 + $0x20] sm:$0xf]
  %v36 = vld [vmem:[%s0 + $0x24] sm:$0xf]
  %v37 = vld [vmem:[%s0 + $0x28] sm:$0xf]
  %v38 = vld [vmem:[%s0 + $0x2c] sm:$0xf]
  %v39 = vld [vmem:[%s0 + $0x30] sm:$0xf]
  %v40 = vld [vmem:[%s0 + $0x34] sm:$0xf]
  %v41 = vld [vmem:[%s0 + $0x38] sm:$0xf]
  %v42 = vld [vmem:[%s0 + $0x3c] sm:$0xf]
  %v43 = vld [vmem:[%s0 + $0x40] sm:$0xf]
  %v44 = vld [vmem:[%s0 + $0x44] sm:$0xf]
  %v45 = vld [vmem:[%s0 + $0x48] sm:$0xf]
  %v46 = vld [vmem:[%s0 + $0x4c] sm:$0xf]
  %v47 = vld [vmem:[%s0 + $0x50] sm:$0xf]
  %v48 = vld [vmem:[%s0 + $0x54] sm:$0xf]
  %v49 = vld [vmem:[%s0 + $0x58] sm:$0xf]
  %v50 = vld [vmem:[%s0 + $0x5c] sm:$0xf]
  %v51 = vld [vmem:[%s0 + $0x60] sm:$0xf]
  %v52 = vld [vmem:[%s0 + $0x64] sm:$0xf]
  %v53 = vld [vmem:[%s0 + $0x68] sm:$0xf]
  %v54 = vld [vmem:[%s0 + $0x6c] sm:$0xf]
  %v55 = vld [vmem:[%s0 + $0x70] sm:$0xf]
  %v56 = vld [vmem:[%s0 + $0x74] sm:$0xf]
  %v57 = vld [vmem:[%s0 + $0x78] sm:$0xf]
  %v58 = vld [vmem:[%s0 + $0x7c] sm:$0xf]
  %v59 = vld [vmem:[%s0 + $0x80] sm:$0xf]
  %v60 = vld [vmem:[%s0 + $0x84] sm:$0xf]
  %v61 = vld [vmem:[%s0 + $0x88] sm:$0xf]
  %v62 = vld [vmem:[%s0 + $0x8c] sm:$0xf]
  %v63 = vld [vmem:[%s0 + $0x90] sm:$0xf]
  %v64 = vld [vmem:[%s0 + $0x94] sm:$0xf]
  %v65 = vld [vmem:[%s0 + $0x98] sm:$0xf]
  %v66 = vld [vmem:[%s0 + $0x9c] sm:$0xf]
  %v67 = vld [vmem:[%s0 + $0xa0] sm:$0xf]
  %v68 = vld [vmem:[%s0 + $0xa4] sm:$0xf]
  %v69 = vld [vmem:[%s0 + $0xa8] sm:$0xf]
  %v70 = vld [vmem:[%s0 + $0xac] sm:$0xf]
  %v71 = vld [vmem:[%s0 + $0xb0] sm:$0xf]
  %v72 = vld [vmem:[%s0 + $0xb4] sm:$0xf]
  %v73 = vld [vmem:[%s0 + $0xb8] sm:$0xf]
  %v74 = vld [vmem:[%s0 + $0xbc] sm:$0xf]
  %v75 = vld [vmem:[%s0 + $0xc0] sm:$0xf]
  %v76 = vld [vmem:[%s0 + $0xc4] sm:$0xf]
  %v77 = vld [vmem:[%s0 + $0xc8] sm:$0xf]
  %v78 = vld [vmem:[%s0 + $0xcc] sm:$0xf]
  %v79 = vld [vmem:[%s0 + $0xd0] sm:$0xf]
  %v80 = vld [vmem:[%s0 + $0xd4] sm:$0xf]
  %v81 = vld [vmem:[%s0 + $0xd8] sm:$0xf]
  %v82 = vld [vmem:[%s0 + $0xdc] sm:$0xf]
  %v83 = vld [vmem:[%s0 + $0xe0] sm:$0xf]
  %v84 = vld [vmem:[%s0 + $0xe4] sm:$0xf]
  %v85 = vld [vmem:[%s0 + $0xe8] sm:$0xf]
  %v86 = vld [vmem:[%s0 + $0xec] sm:$0xf]
  %v87 = vld [vmem:[%s0 + $0xf0] sm:$0xf]
  %v88 = vld [vmem:[%s0 + $0xf4] sm:$0xf]
  %v89 = vld [vmem:[%s0 + $0xf8] sm:$0xf]
  %v90 = vld [vmem:[%s0 + $0xfc] sm:$0xf]
  %v91 = vld [vmem:[%s0 + $0x100] sm:$0xf]
  %v92 = vld [vmem:[%s0 + $0x104] sm:$0xf]
  %v93 = vld [vmem:[%s0 + $0x108] sm:$0xf]
  %v94 = vld [vmem:[%s0 + $0x10c] sm:$0xf]
  %v95 = vld [vmem:[%s0 + $0x110] sm:$0xf]
  %v96 = vld [vmem:[%s0 + $0x114] sm:$0xf]
  %v97 = vld [vmem:[%s0 + $0x118] sm:$0xf]
  %v98 = vld [vmem:[%s0 + $0x11c] sm:$0xf]
  %v99 = vld [vmem:[%s0 + $0x120] sm:$0xf]
  %v100 = vld [vmem:[%s0 + $0x124] sm:$0xf]
  %v101 = vld [vmem:[%s0 + $0x128] sm:$0xf]
  %v102 = vld [vmem:[%s0 + $0x12c] sm:$0xf]
  %v103 = vld [vmem:[%s0 + $0x130] sm:$0xf]
  %v104 = vld [vmem:[%s0 + $0x134] sm:$0xf]
  %v105 = vld [vmem:[%s0 + $0x138] sm:$0xf]
  %v106 = vld [vmem:[%s0 + $0x13c] sm:$0xf]
  %v107 = vld [vmem:[%s0 + $0x140] sm:$0xf]
  %v108 = vld [vmem:[%s0 + $0x144] sm:$0xf]
  %v109 = vld [vmem:[%s0 + $0x148] sm:$0xf]
  %v110 = vld [vmem:[%s0 + $0x14c] sm:$0xf]
  %v111 = vld [vmem:[%s0 + $0x150] sm:$0xf]
  %v112 = vld [vmem:[%s0 + $0x154] sm:$0xf]
  %v113 = vld [vmem:[%s0 + $0x158] sm:$0xf]
  %v114 = vld [vmem:[%s0 + $0x15c] sm:$0xf]
  %v115 = vld [vmem:[%s0 + $0x160] sm:$0xf]
  %v116 = vld [vmem:[%s0 + $0x164] sm:$0xf]
  %v117 = vld [vmem:[%s0 + $0x168] sm:$0xf]
  %v118 = vld [vmem:[%s0 + $0x16c] sm:$0xf]
  %v119 = vld [vmem:[%s0 + $0x170] sm:$0xf]
  %v120 = vld [vmem:[%s0 + $0x174] sm:$0xf]
  %v121 = vld [vmem:[%s0 + $0x178] sm:$0xf]
  %v122 = vld [vmem:[%s0 + $0x17c] sm:$0xf]
  %v123 = vld [vmem:[%s0 + $0x180] sm:$0xf]
  %v124 = vld [vmem:[%s0 + $0x184] sm:$0xf]
  %v125 = vld [vmem:[%s1] sm:$0xff]
  %v126 = vld [vmem:[%s1 + $0x8] sm:$0xff]
  %v127 = vld [vmem:[%s1 + $0x10] sm:$0xff]
  %v128 = vld [vmem:[%s1 + $0x18] sm:$0xf]
  %v129 = vld [vmem:[%s1 + $0x1c] sm:$0x77]
  %v130 = vld [vmem:[%s1 + $0x24] sm:$0x77]
  %v131 = vld [vmem:[%s1 + $0x2c] sm:$0x77]
  %v132 = vld [vmem:[%s1 + $0x34] sm:$0x7]
  %v133 = vld [vmem:[%s2] sm:$0xff]
  %v134 = vld [vmem:[%s2 + $0x8] sm:$0x3f]
  %136 = vset.pattern.permute.xlu0 0
  %137 = vperm.xlu0 %136, %v133
  %v138 = vpop.permute.xlu0 %137
  %141 = vset.pattern.permute.xlu0 0
  %142 = vperm.xlu0 %141, %v134
  %v143 = vpop.permute.xlu0 %142
  %v153 = vunpack.c.l.b16 %v125
  %v154 = vunpack.c.h.b16 %v125
  %v155 = vunpack.c.l.b16 %v126
  %v156 = vunpack.c.h.b16 %v126
  %v157 = vunpack.c.l.b16 %v127
  %v158 = vunpack.c.h.b16 %v127
  %v159 = vunpack.c.l.b16 %v128
  %v160 = vunpack.c.l.b16 %v129
  %v161 = vunpack.c.h.b16 %v129
  %v162 = vunpack.c.l.b16 %v130
  %v163 = vunpack.c.h.b16 %v130
  %v164 = vunpack.c.l.b16 %v131
  %v165 = vunpack.c.h.b16 %v131
  %v166 = vunpack.c.l.b16 %v132
  %v167 = vpack.c.b16 %v160, %v153
  %v168 = vpack.c.b16 %v161, %v154
  %v169 = vpack.c.b16 %v162, %v155
  %v170 = vpack.c.b16 %v163, %v156
  %v171 = vpack.c.b16 %v164, %v157
  %v172 = vpack.c.b16 %v165, %v158
  %v173 = vpack.c.b16 %v166, %v159
  %v278 = vunpack.c.l.b16 %v27
  %v279 = vunpack.c.l.b16 %v28
  %v280 = vunpack.c.l.b16 %v29
  %v281 = vunpack.c.l.b16 %v30
  %v282 = vunpack.c.l.b16 %v31
  %v283 = vunpack.c.l.b16 %v32
  %v284 = vunpack.c.l.b16 %v33
  %v285 = vunpack.c.l.b16 %v34
  %v286 = vunpack.c.l.b16 %v35
  %v287 = vunpack.c.l.b16 %v36
  %v288 = vunpack.c.l.b16 %v37
  %v289 = vunpack.c.l.b16 %v38
  %v290 = vunpack.c.l.b16 %v39
  %v291 = vunpack.c.l.b16 %v40
  %v292 = vunpack.c.l.b16 %v41
  %v293 = vunpack.c.l.b16 %v42
  %v294 = vunpack.c.l.b16 %v43
  %v295 = vunpack.c.l.b16 %v44
  %v296 = vunpack.c.l.b16 %v45
  %v297 = vunpack.c.l.b16 %v46
  %v298 = vunpack.c.l.b16 %v47
  %v299 = vunpack.c.l.b16 %v48
  %v300 = vunpack.c.l.b16 %v49
  %v301 = vunpack.c.l.b16 %v50
  %v302 = vunpack.c.l.b16 %v51
  %v303 = vunpack.c.l.b16 %v52
  %v304 = vunpack.c.l.b16 %v53
  %v305 = vunpack.c.l.b16 %v54
  %v306 = vunpack.c.l.b16 %v55
  %v307 = vunpack.c.l.b16 %v56
  %v308 = vunpack.c.l.b16 %v57
  %v309 = vunpack.c.l.b16 %v58
  %v310 = vunpack.c.l.b16 %v59
  %v311 = vunpack.c.l.b16 %v60
  %v312 = vunpack.c.l.b16 %v61
  %v313 = vunpack.c.l.b16 %v62
  %v314 = vunpack.c.l.b16 %v63
  %v315 = vunpack.c.l.b16 %v64
  %v316 = vunpack.c.l.b16 %v65
  %v317 = vunpack.c.l.b16 %v66
  %v318 = vunpack.c.l.b16 %v67
  %v319 = vunpack.c.l.b16 %v68
  %v320 = vunpack.c.l.b16 %v69
  %v321 = vunpack.c.l.b16 %v70
  %v322 = vunpack.c.l.b16 %v71
  %v323 = vunpack.c.l.b16 %v72
  %v324 = vunpack.c.l.b16 %v73
  %v325 = vunpack.c.l.b16 %v74
  %v326 = vunpack.c.l.b16 %v75
  %v327 = vunpack.c.l.b16 %v76
  %v328 = vunpack.c.l.b16 %v77
  %v329 = vunpack.c.l.b16 %v78
  %v330 = vunpack.c.l.b16 %v79
  %v331 = vunpack.c.l.b16 %v80
  %v332 = vunpack.c.l.b16 %v81
  %v333 = vunpack.c.l.b16 %v82
  %v334 = vunpack.c.l.b16 %v83
  %v335 = vunpack.c.l.b16 %v84
  %v336 = vunpack.c.l.b16 %v85
  %v337 = vunpack.c.l.b16 %v86
  %v338 = vunpack.c.l.b16 %v87
  %v339 = vunpack.c.l.b16 %v88
  %v340 = vunpack.c.l.b16 %v89
  %v341 = vunpack.c.l.b16 %v90
  %v342 = vunpack.c.l.b16 %v91
  %v343 = vunpack.c.l.b16 %v92
  %v344 = vunpack.c.l.b16 %v93
  %v345 = vunpack.c.l.b16 %v94
  %v346 = vunpack.c.l.b16 %v95
  %v347 = vunpack.c.l.b16 %v96
  %v348 = vunpack.c.l.b16 %v97
  %v349 = vunpack.c.l.b16 %v98
  %v350 = vunpack.c.l.b16 %v99
  %v351 = vunpack.c.l.b16 %v100
  %v352 = vunpack.c.l.b16 %v101
  %v353 = vunpack.c.l.b16 %v102
  %v354 = vunpack.c.l.b16 %v103
  %v355 = vunpack.c.l.b16 %v104
  %v356 = vunpack.c.l.b16 %v105
  %v357 = vunpack.c.l.b16 %v106
  %v358 = vunpack.c.l.b16 %v107
  %v359 = vunpack.c.l.b16 %v108
  %v360 = vunpack.c.l.b16 %v109
  %v361 = vunpack.c.l.b16 %v110
  %v362 = vunpack.c.l.b16 %v111
  %v363 = vunpack.c.l.b16 %v112
  %v364 = vunpack.c.l.b16 %v113
  %v365 = vunpack.c.l.b16 %v114
  %v366 = vunpack.c.l.b16 %v115
  %v367 = vunpack.c.l.b16 %v116
  %v368 = vunpack.c.l.b16 %v117
  %v369 = vunpack.c.l.b16 %v118
  %v370 = vunpack.c.l.b16 %v119
  %v371 = vunpack.c.l.b16 %v120
  %v372 = vunpack.c.l.b16 %v121
  %v373 = vunpack.c.l.b16 %v122
  %v374 = vunpack.c.l.b16 %v123
  %v375 = vunpack.c.l.b16 %v124
  %v376 = vpack.c.b16 %v279, %v278
  %v377 = vpack.c.b16 %v281, %v280
  %v378 = vpack.c.b16 %v283, %v282
  %v379 = vpack.c.b16 %v285, %v284
  %v380 = vpack.c.b16 %v287, %v286
  %v381 = vpack.c.b16 %v289, %v288
  %v382 = vpack.c.b16 %v291, %v290
  %v383 = vpack.c.b16 %v293, %v292
  %v384 = vpack.c.b16 %v295, %v294
  %v385 = vpack.c.b16 %v297, %v296
  %v386 = vpack.c.b16 %v299, %v298
  %v387 = vpack.c.b16 %v301, %v300
  %v388 = vpack.c.b16 %v303, %v302
  %v389 = vpack.c.b16 %v305, %v304
  %v390 = vpack.c.b16 %v307, %v306
  %v391 = vpack.c.b16 %v309, %v308
  %v392 = vpack.c.b16 %v311, %v310
  %v393 = vpack.c.b16 %v313, %v312
  %v394 = vpack.c.b16 %v315, %v314
  %v395 = vpack.c.b16 %v317, %v316
  %v396 = vpack.c.b16 %v319, %v318
  %v397 = vpack.c.b16 %v321, %v320
  %v398 = vpack.c.b16 %v323, %v322
  %v399 = vpack.c.b16 %v325, %v324
  %v400 = vpack.c.b16 %v327, %v326
  %v401 = vpack.c.b16 %v329, %v328
  %v402 = vpack.c.b16 %v331, %v330
  %v403 = vpack.c.b16 %v333, %v332
  %v404 = vpack.c.b16 %v335, %v334
  %v405 = vpack.c.b16 %v337, %v336
  %v406 = vpack.c.b16 %v339, %v338
  %v407 = vpack.c.b16 %v341, %v340
  %v408 = vpack.c.b16 %v343, %v342
  %v409 = vpack.c.b16 %v345, %v344
  %v410 = vpack.c.b16 %v347, %v346
  %v411 = vpack.c.b16 %v349, %v348
  %v412 = vpack.c.b16 %v351, %v350
  %v413 = vpack.c.b16 %v353, %v352
  %v414 = vpack.c.b16 %v355, %v354
  %v415 = vpack.c.b16 %v357, %v356
  %v416 = vpack.c.b16 %v359, %v358
  %v417 = vpack.c.b16 %v361, %v360
  %v418 = vpack.c.b16 %v363, %v362
  %v419 = vpack.c.b16 %v365, %v364
  %v420 = vpack.c.b16 %v367, %v366
  %v421 = vpack.c.b16 %v369, %v368
  %v422 = vpack.c.b16 %v371, %v370
  %v423 = vpack.c.b16 %v373, %v372
  %v424 = vpack.c.b16 %v375, %v374
  %vm474 = vcmask 130048
  %v476 = vsel %vm474, %v173, 0
  %478 = vmatprep.subr.bf16.mxu0 0
  %479 = vmatpush1.bf16.msra.mxu0 %v376
  %480 = vmatprep.subr.bf16.mxu0 0
  %481 = vmatpush1.bf16.msra.mxu0 %v377
  %482 = vmatprep.subr.bf16.mxu0 0
  %483 = vmatpush1.bf16.msra.mxu0 %v378
  %484 = vmatprep.subr.bf16.mxu0 0
  %485 = vmatpush1.bf16.msra.mxu0 %v379
  %486 = vmatprep.subr.bf16.mxu0 0
  %487 = vmatpush1.bf16.msra.mxu0 %v380
  %488 = vmatprep.subr.bf16.mxu0 0
  %489 = vmatpush1.bf16.msra.mxu0 %v381
  %490 = vmatprep.subr.bf16.mxu0 0
  %491 = vmatpush1.bf16.msra.mxu0 %v382
  %492 = vmatprep.subr.bf16.mxu0 0
  %493 = vmatpush1.bf16.msra.mxu0 %v383
  %494 = vmatprep.subr.bf16.mxu0 0
  %495 = vmatpush1.bf16.msra.mxu0 %v384
  %496 = vmatprep.subr.bf16.mxu0 0
  %497 = vmatpush1.bf16.msra.mxu0 %v385
  %498 = vmatprep.subr.bf16.mxu0 0
  %499 = vmatpush1.bf16.msra.mxu0 %v386
  %500 = vmatprep.subr.bf16.mxu0 0
  %501 = vmatpush1.bf16.msra.mxu0 %v387
  %502 = vmatprep.subr.bf16.mxu0 0
  %503 = vmatpush1.bf16.msra.mxu0 %v388
  %504 = vmatprep.subr.bf16.mxu0 0
  %505 = vmatpush1.bf16.msra.mxu0 %v389
  %506 = vmatprep.subr.bf16.mxu0 0
  %507 = vmatpush1.bf16.msra.mxu0 %v390
  %508 = vmatprep.subr.bf16.mxu0 0
  %509 = vmatpush1.bf16.msra.mxu0 %v391
  %510 = vmatprep.mubr.bf16.mxu0 %v168
  %511 = vmatmul.mubr.bf16.gmra.mrb[0].mxu0 %v167
  %v512 = vpop.f32.mrb[0].mxu0
  %v513 = vadd.f32 %v138, %v512
  %v514 = vpop.f32.mrb[0].mxu0
  %v515 = vpop.f32.mrb[0].mxu0
  %v516 = vadd.f32 %v143, %v515
  %v517 = vpop.f32.mrb[0].mxu0
  %518 = vdwg.mxu0
  %519 = vmatprep.subr.bf16.mxu0 0
  %520 = vmatpush1.bf16.msra.mxu0 %v392
  %521 = vmatprep.subr.bf16.mxu0 0
  %522 = vmatpush1.bf16.msra.mxu0 %v393
  %523 = vmatprep.subr.bf16.mxu0 0
  %524 = vmatpush1.bf16.msra.mxu0 %v394
  %525 = vmatprep.subr.bf16.mxu0 0
  %526 = vmatpush1.bf16.msra.mxu0 %v395
  %527 = vmatprep.subr.bf16.mxu0 0
  %528 = vmatpush1.bf16.msra.mxu0 %v396
  %529 = vmatprep.subr.bf16.mxu0 0
  %530 = vmatpush1.bf16.msra.mxu0 %v397
  %531 = vmatprep.subr.bf16.mxu0 0
  %532 = vmatpush1.bf16.msra.mxu0 %v398
  %533 = vmatprep.subr.bf16.mxu0 0
  %534 = vmatpush1.bf16.msra.mxu0 %v399
  %535 = vmatprep.subr.bf16.mxu0 0
  %536 = vmatpush1.bf16.msra.mxu0 %v400
  %537 = vmatprep.subr.bf16.mxu0 0
  %538 = vmatpush1.bf16.msra.mxu0 %v401
  %539 = vmatprep.subr.bf16.mxu0 0
  %540 = vmatpush1.bf16.msra.mxu0 %v402
  %541 = vmatprep.subr.bf16.mxu0 0
  %542 = vmatpush1.bf16.msra.mxu0 %v403
  %543 = vmatprep.subr.bf16.mxu0 0
  %544 = vmatpush1.bf16.msra.mxu0 %v404
  %545 = vmatprep.subr.bf16.mxu0 0
  %546 = vmatpush1.bf16.msra.mxu0 %v405
  %547 = vmatprep.subr.bf16.mxu0 0
  %548 = vmatpush1.bf16.msra.mxu0 %v406
  %549 = vmatprep.subr.bf16.mxu0 0
  %550 = vmatpush1.bf16.msra.mxu0 %v407
  %551 = vmatprep.mubr.bf16.mxu0 %v170
  %552 = vmatmul.mubr.bf16.gmra.mrb[0].mxu0 %v169
  %v553 = vpop.f32.mrb[0].mxu0
  %v554 = vadd.f32 %v513, %v553
  %v555 = vpop.f32.mrb[0].mxu0
  %v556 = vpop.f32.mrb[0].mxu0
  %v557 = vadd.f32 %v516, %v556
  %v558 = vpop.f32.mrb[0].mxu0
  %559 = vdwg.mxu0
  %560 = vmatprep.subr.bf16.mxu0 0
  %561 = vmatpush1.bf16.msra.mxu0 %v408
  %562 = vmatprep.subr.bf16.mxu0 0
  %563 = vmatpush1.bf16.msra.mxu0 %v409
  %564 = vmatprep.subr.bf16.mxu0 0
  %565 = vmatpush1.bf16.msra.mxu0 %v410
  %566 = vmatprep.subr.bf16.mxu0 0
  %567 = vmatpush1.bf16.msra.mxu0 %v411
  %568 = vmatprep.subr.bf16.mxu0 0
  %569 = vmatpush1.bf16.msra.mxu0 %v412
  %570 = vmatprep.subr.bf16.mxu0 0
  %571 = vmatpush1.bf16.msra.mxu0 %v413
  %572 = vmatprep.subr.bf16.mxu0 0
  %573 = vmatpush1.bf16.msra.mxu0 %v414
  %574 = vmatprep.subr.bf16.mxu0 0
  %575 = vmatpush1.bf16.msra.mxu0 %v415
  %576 = vmatprep.subr.bf16.mxu0 0
  %577 = vmatpush1.bf16.msra.mxu0 %v416
  %578 = vmatprep.subr.bf16.mxu0 0
  %579 = vmatpush1.bf16.msra.mxu0 %v417
  %580 = vmatprep.subr.bf16.mxu0 0
  %581 = vmatpush1.bf16.msra.mxu0 %v418
  %582 = vmatprep.subr.bf16.mxu0 0
  %583 = vmatpush1.bf16.msra.mxu0 %v419
  %584 = vmatprep.subr.bf16.mxu0 0
  %585 = vmatpush1.bf16.msra.mxu0 %v420
  %586 = vmatprep.subr.bf16.mxu0 0
  %587 = vmatpush1.bf16.msra.mxu0 %v421
  %588 = vmatprep.subr.bf16.mxu0 0
  %589 = vmatpush1.bf16.msra.mxu0 %v422
  %590 = vmatprep.subr.bf16.mxu0 0
  %591 = vmatpush1.bf16.msra.mxu0 %v423
  %592 = vmatprep.mubr.bf16.mxu0 %v172
  %593 = vmatmul.mubr.bf16.gmra.mrb[0].mxu0 %v171
  %v594 = vpop.f32.mrb[0].mxu0
  %v595 = vadd.f32 %v554, %v594
  %v596 = vpop.f32.mrb[0].mxu0
  %v597 = vpop.f32.mrb[0].mxu0
  %v598 = vadd.f32 %v557, %v597
  %v599 = vpop.f32.mrb[0].mxu0
  %600 = vdwg.mxu0
  %601 = vmatprep.subr.bf16.mxu0 0
  %602 = vmatpush1.bf16.msra.mxu0 %v424
  %603 = vmatprep.subr.bf16.mxu0 0
  %604 = vmatpush1.bf16.msra.mxu0 0
  %605 = vmatprep.subr.bf16.mxu0 0
  %606 = vmatpush1.bf16.msra.mxu0 0
  %607 = vmatprep.subr.bf16.mxu0 0
  %608 = vmatpush1.bf16.msra.mxu0 0
  %609 = vmatprep.subr.bf16.mxu0 0
  %610 = vmatpush1.bf16.msra.mxu0 0
  %611 = vmatprep.subr.bf16.mxu0 0
  %612 = vmatpush1.bf16.msra.mxu0 0
  %613 = vmatprep.subr.bf16.mxu0 0
  %614 = vmatpush1.bf16.msra.mxu0 0
  %615 = vmatprep.subr.bf16.mxu0 0
  %616 = vmatpush1.bf16.msra.mxu0 0
  %617 = vmatprep.subr.bf16.mxu0 0
  %618 = vmatpush1.bf16.msra.mxu0 0
  %619 = vmatprep.subr.bf16.mxu0 0
  %620 = vmatpush1.bf16.msra.mxu0 0
  %621 = vmatprep.subr.bf16.mxu0 0
  %622 = vmatpush1.bf16.msra.mxu0 0
  %623 = vmatprep.subr.bf16.mxu0 0
  %624 = vmatpush1.bf16.msra.mxu0 0
  %625 = vmatprep.subr.bf16.mxu0 0
  %626 = vmatpush1.bf16.msra.mxu0 0
  %627 = vmatprep.subr.bf16.mxu0 0
  %628 = vmatpush1.bf16.msra.mxu0 0
  %629 = vmatprep.subr.bf16.mxu0 0
  %630 = vmatpush1.bf16.msra.mxu0 0
  %631 = vmatprep.subr.bf16.mxu0 0
  %632 = vmatpush1.bf16.msra.mxu0 0
  %633 = vmatprep.mubr.bf16.mxu0 0
  %634 = vmatmul.mubr.bf16.gmra.mrb[0].mxu0 %v476
  %v635 = vpop.f32.mrb[0].mxu0
  %v636 = vadd.f32 %v595, %v635
  %v637 = vpop.f32.mrb[0].mxu0
  %v638 = vpop.f32.mrb[0].mxu0
  %v639 = vadd.f32 %v598, %v638
  %v640 = vpop.f32.mrb[0].mxu0
  %641 = vdwg.mxu0
  %v642 = vmax.f32 %v636, 0.0
  %v643 = vmax.f32 %v639, 0.0
  %v644 = vld [vmem:[%s3] sm:$0xff]
  %v645 = vld [vmem:[%s3 + $0x8] sm:$0x3f]
  %v646 = vld [vmem:[%s4] sm:$0xff]
  %v647 = vld [vmem:[%s4 + $0x8] sm:$0x3f]
  %649 = vset.pattern.permute.xlu0 0
  %650 = vperm.xlu0 %649, %v646
  %v651 = vpop.permute.xlu0 %650
  %654 = vset.pattern.permute.xlu0 0
  %655 = vperm.xlu0 %654, %v647
  %v656 = vpop.permute.xlu0 %655
  %vm658 = vcmask 113664
  %v660 = vsel %vm658, %v644, 0
  %v663 = vsel %vm658, %v645, 0
  %vm665 = vcmask 1045504
  %v667 = vsel %vm665, %v643, 0
  %669 = vmatprep.subr.mxu0 0.0
  %670 = vmatpush1.msra.mxu0 %v642
  %671 = vmatprep.subr.mxu0 0.0
  %672 = vmatpush1.msra.mxu0 %v667
  %673 = vmatprep.subr.mxu0 0.0
  %674 = vmatpush1.msra.mxu0 0.0
  %675 = vmatprep.subr.mxu0 0.0
  %676 = vmatpush1.msra.mxu0 0.0
  %677 = vmatprep.subr.mxu0 0.0
  %678 = vmatpush1.msra.mxu0 0.0
  %679 = vmatprep.subr.mxu0 0.0
  %680 = vmatpush1.msra.mxu0 0.0
  %681 = vmatprep.subr.mxu0 0.0
  %682 = vmatpush1.msra.mxu0 0.0
  %683 = vmatprep.subr.mxu0 0.0
  %684 = vmatpush1.msra.mxu0 0.0
  %685 = vmatprep.subr.mxu0 0.0
  %686 = vmatpush1.msra.mxu0 0.0
  %687 = vmatprep.subr.mxu0 0.0
  %688 = vmatpush1.msra.mxu0 0.0
  %689 = vmatprep.subr.mxu0 0.0
  %690 = vmatpush1.msra.mxu0 0.0
  %691 = vmatprep.subr.mxu0 0.0
  %692 = vmatpush1.msra.mxu0 0.0
  %693 = vmatprep.subr.mxu0 0.0
  %694 = vmatpush1.msra.mxu0 0.0
  %695 = vmatprep.subr.mxu0 0.0
  %696 = vmatpush1.msra.mxu0 0.0
  %697 = vmatprep.subr.mxu0 0.0
  %698 = vmatpush1.msra.mxu0 0.0
  %699 = vmatprep.subr.mxu0 0.0
  %700 = vmatpush1.msra.mxu0 0.0
  %701 = vmatprep.subr.mxu0 0.0
  %702 = vmatpush1.msra.mxu0 0.0
  %703 = vmatprep.subr.mxu0 0.0
  %704 = vmatpush1.msra.mxu0 0.0
  %705 = vmatprep.subr.mxu0 0.0
  %706 = vmatpush1.msra.mxu0 0.0
  %707 = vmatprep.subr.mxu0 0.0
  %708 = vmatpush1.msra.mxu0 0.0
  %709 = vmatprep.subr.mxu0 0.0
  %710 = vmatpush1.msra.mxu0 0.0
  %711 = vmatprep.subr.mxu0 0.0
  %712 = vmatpush1.msra.mxu0 0.0
  %713 = vmatprep.subr.mxu0 0.0
  %714 = vmatpush1.msra.mxu0 0.0
  %715 = vmatprep.subr.mxu0 0.0
  %716 = vmatpush1.msra.mxu0 0.0
  %717 = vmatprep.subr.mxu0 0.0
  %718 = vmatpush1.msra.mxu0 0.0
  %719 = vmatprep.subr.mxu0 0.0
  %720 = vmatpush1.msra.mxu0 0.0
  %721 = vmatprep.subr.mxu0 0.0
  %722 = vmatpush1.msra.mxu0 0.0
  %723 = vmatprep.subr.mxu0 0.0
  %724 = vmatpush1.msra.mxu0 0.0
  %725 = vmatprep.subr.mxu0 0.0
  %726 = vmatpush1.msra.mxu0 0.0
  %727 = vmatprep.subr.mxu0 0.0
  %728 = vmatpush1.msra.mxu0 0.0
  %729 = vmatprep.subr.mxu0 0.0
  %730 = vmatpush1.msra.mxu0 0.0
  %731 = vmatprep.subr.mxu0 0.0
  %732 = vmatpush1.msra.mxu0 0.0
  %733 = vmatprep.mubr.f32.mxu0 0.0
  %734 = vmatmul.mubr.f32.gmra.mrb[0].mxu0 %v660
  %v735 = vpop.f32.mrb[0].mxu0
  %v736 = vadd.f32 %v651, %v735
  %v737 = vpop.f32.mrb[0].mxu0
  %738 = vmatprep.mubr.f32.mxu0 0.0
  %739 = vmatmul.mubr.f32.gmra.mrb[0].mxu0 %v663
  %v740 = vpop.f32.mrb[0].mxu0
  %v741 = vadd.f32 %v656, %v740
  %v742 = vpop.f32.mrb[0].mxu0
  %743 = vdwg.mxu0
  %v744 = vmax.f32 %v736, 0.0
  %v745 = vmax.f32 %v741, 0.0
  %v746 = vld [vmem:[%s5] sm:$0xff]
  %v747 = vld [vmem:[%s5 + $0x8] sm:$0x3]
  %v748 = vld [vmem:[%s6] sm:$0xff]
  %v749 = vld [vmem:[%s6 + $0x8] sm:$0x3]
  %751 = vset.pattern.permute.xlu0 0
  %752 = vperm.xlu0 %751, %v748
  %v753 = vpop.permute.xlu0 %752
  %756 = vset.pattern.permute.xlu0 0
  %757 = vperm.xlu0 %756, %v749
  %v758 = vpop.permute.xlu0 %757
  %v761 = vsel %vm658, %v746, 0
  %v764 = vsel %vm658, %v747, 0
  %v767 = vsel %vm665, %v745, 0
  %769 = vmatprep.subr.mxu0 0.0
  %770 = vmatpush1.msra.mxu0 %v744
  %771 = vmatprep.subr.mxu0 0.0
  %772 = vmatpush1.msra.mxu0 %v767
  %773 = vmatprep.subr.mxu0 0.0
  %774 = vmatpush1.msra.mxu0 0.0
  %775 = vmatprep.subr.mxu0 0.0
  %776 = vmatpush1.msra.mxu0 0.0
  %777 = vmatprep.subr.mxu0 0.0
  %778 = vmatpush1.msra.mxu0 0.0
  %779 = vmatprep.subr.mxu0 0.0
  %780 = vmatpush1.msra.mxu0 0.0
  %781 = vmatprep.subr.mxu0 0.0
  %782 = vmatpush1.msra.mxu0 0.0
  %783 = vmatprep.subr.mxu0 0.0
  %784 = vmatpush1.msra.mxu0 0.0
  %785 = vmatprep.subr.mxu0 0.0
  %786 = vmatpush1.msra.mxu0 0.0
  %787 = vmatprep.subr.mxu0 0.0
  %788 = vmatpush1.msra.mxu0 0.0
  %789 = vmatprep.subr.mxu0 0.0
  %790 = vmatpush1.msra.mxu0 0.0
  %791 = vmatprep.subr.mxu0 0.0
  %792 = vmatpush1.msra.mxu0 0.0
  %793 = vmatprep.subr.mxu0 0.0
  %794 = vmatpush1.msra.mxu0 0.0
  %795 = vmatprep.subr.mxu0 0.0
  %796 = vmatpush1.msra.mxu0 0.0
  %797 = vmatprep.subr.mxu0 0.0
  %798 = vmatpush1.msra.mxu0 0.0
  %799 = vmatprep.subr.mxu0 0.0
  %800 = vmatpush1.msra.mxu0 0.0
  %801 = vmatprep.subr.mxu0 0.0
  %802 = vmatpush1.msra.mxu0 0.0
  %803 = vmatprep.subr.mxu0 0.0
  %804 = vmatpush1.msra.mxu0 0.0
  %805 = vmatprep.subr.mxu0 0.0
  %806 = vmatpush1.msra.mxu0 0.0
  %807 = vmatprep.subr.mxu0 0.0
  %808 = vmatpush1.msra.mxu0 0.0
  %809 = vmatprep.subr.mxu0 0.0
  %810 = vmatpush1.msra.mxu0 0.0
  %811 = vmatprep.subr.mxu0 0.0
  %812 = vmatpush1.msra.mxu0 0.0
  %813 = vmatprep.subr.mxu0 0.0
  %814 = vmatpush1.msra.mxu0 0.0
  %815 = vmatprep.subr.mxu0 0.0
  %816 = vmatpush1.msra.mxu0 0.0
  %817 = vmatprep.subr.mxu0 0.0
  %818 = vmatpush1.msra.mxu0 0.0
  %819 = vmatprep.subr.mxu0 0.0
  %820 = vmatpush1.msra.mxu0 0.0
  %821 = vmatprep.subr.mxu0 0.0
  %822 = vmatpush1.msra.mxu0 0.0
  %823 = vmatprep.subr.mxu0 0.0
  %824 = vmatpush1.msra.mxu0 0.0
  %825 = vmatprep.subr.mxu0 0.0
  %826 = vmatpush1.msra.mxu0 0.0
  %827 = vmatprep.subr.mxu0 0.0
  %828 = vmatpush1.msra.mxu0 0.0
  %829 = vmatprep.subr.mxu0 0.0
  %830 = vmatpush1.msra.mxu0 0.0
  %831 = vmatprep.subr.mxu0 0.0
  %832 = vmatpush1.msra.mxu0 0.0
  %833 = vmatprep.mubr.f32.mxu0 0.0
  %834 = vmatmul.mubr.f32.gmra.mrb[0].mxu0 %v761
  %v835 = vpop.f32.mrb[0].mxu0
  %v836 = vadd.f32 %v753, %v835
  %v837 = vpop.f32.mrb[0].mxu0
  %838 = vmatprep.mubr.f32.mxu0 0.0
  %839 = vmatmul.mubr.f32.gmra.mrb[0].mxu0 %v764
  %v840 = vpop.f32.mrb[0].mxu0
  %v841 = vadd.f32 %v758, %v840
  %v842 = vpop.f32.mrb[0].mxu0
  %843 = vdwg.mxu0
  %v844 = vmax.f32 %v836, 0.0
  %v845 = vmax.f32 %v841, 0.0
  %vm846 = vcmask 15360
  %v847 = vsel %vm846, %v844, -inf
  %vm848 = vcmask 9216
  %v849 = vsel %vm848, %v845, -inf
  %v850 = vmax.f32 %v847, %v849
  %v851 = vrot.slane %v850, 4
  %v852 = vmax.f32 %v850, %v851
  %v853 = vrot.slane %v852, 2
  %v854 = vmax.f32 %v852, %v853
  %v855 = vrot.slane %v854, 1
  %v856 = vmax.f32 %v854, %v855
  %v857 = vsub.f32 %v844, %v856
  %v858 = vsub.f32 %v845, %v856
  %v859 = vmul.f32 %v857, 1.442695
  %v860 = vpow.pop %v859
  %v861 = vmul.f32 %v858, 1.442695
  %v862 = vpow.pop %v861
  %v863 = vsel %vm846, %v860, 0.0
  %v864 = vsel %vm848, %v862, 0.0
  %v865 = vadd.f32 %v863, %v864
  %v866 = vrot.slane %v865, 4
  %v867 = vadd.f32 %v865, %v866
  %v868 = vrot.slane %v867, 2
  %v869 = vadd.f32 %v867, %v868
  %v870 = vrot.slane %v869, 1
  %v871 = vadd.f32 %v869, %v870
  %v872 = vrcp.pop %v871
  %v873 = vmul.f32 %v860, %v872
  %v874 = vmul.f32 %v862, %v872
  %875 = vst.msk [vmem:[%s7] sm:$0xff] %vm846, %v873
  %876 = vst.msk [vmem:[%s7 + $0x8] sm:$0x3] %vm848, %v874
  // Predicated region
  $region30: #{tpu_custom_call.1} parent=0 // pred_check
    _
  $region31: #{tpu_custom_call.1} parent=0 // pred_check_branch
    %878 = sbr.rel (0) target = $region33
  $region32: #{tpu_custom_call.1} parent=0 // pred_region
    _
  $region33: #{tpu_custom_call.1} parent=0 // pred_fallthru
    _
  // Predicated region
  $region34: #{tpu_custom_call.1} parent=0 // pred_check
    _
  $region35: #{tpu_custom_call.1} parent=0 // pred_check_branch
    %880 = sbr.rel (0) target = $region37
  $region36: #{tpu_custom_call.1} parent=0 // pred_region
    _
  $region37: #{tpu_custom_call.1} parent=0 // pred_fallthru
    _

</llo_original>
